<compile_context>
chip_gen: v6e
topology: v6e:2x2x1
jax: 0.10.0
libtpu: 0.0.40
codegen_flags: <defaults>
</compile_context>

<pallas_src>
import functools

import jax
import jax.numpy as jnp
from jax import lax
from jax.experimental import pallas as pl
from jax.experimental.pallas import tpu as pltpu

EPS = 1e-5


# --------------------------------------------------------------------------
# Kernels
# --------------------------------------------------------------------------
def fusion_bn_kernel(w_ref, x1_ref, x2_ref, x3_ref, o_ref):
    """Single-pass: full (N, TC, HW) rows resident; exact centered statistics."""
    w0 = w_ref[0]
    w1 = w_ref[1]
    w2 = w_ref[2]

    n, _, hw = x1_ref.shape             # static block shape
    inv_count = 1.0 / float(n * hw)     # Python constant

    ws = (w0 * x1_ref[...].astype(jnp.float32)
          + w1 * x2_ref[...].astype(jnp.float32)
          + w2 * x3_ref[...].astype(jnp.float32))

    # Reduce over N first (cheap VPU adds), then lane-reduce the (TC, HW) slab
    # on the XLU: cuts cross-lane work by ~N x vs. lane-reducing the full tensor.
    ws_n = jnp.sum(ws, axis=0)                                      # (TC, HW)
    mean = jnp.sum(ws_n, axis=-1, keepdims=True) * inv_count        # (TC, 1)
    centered = ws - mean[None, :, :]                                # (N, TC, HW)
    c_n = jnp.sum(centered * centered, axis=0)                      # (TC, HW)
    var = jnp.sum(c_n, axis=-1, keepdims=True) * inv_count          # (TC, 1)

    o_ref[...] = (centered * lax.rsqrt(var + EPS)[None, :, :]).astype(o_ref.dtype)


def fusion_stats_kernel(w_ref, x1_ref, x2_ref, x3_ref, sum_ref, sq_ref):
    """Two-pass, pass 1: accumulate per-channel sum / sum-of-squares over HW chunks."""
    l = pl.program_id(1)

    @pl.when(l == 0)
    def _():
        sum_ref[...] = jnp.zeros_like(sum_ref)
        sq_ref[...] = jnp.zeros_like(sq_ref)

    w0 = w_ref[0]
    w1 = w_ref[1]
    w2 = w_ref[2]

    ws = (w0 * x1_ref[...].astype(jnp.float32)
          + w1 * x2_ref[...].astype(jnp.float32)
          + w2 * x3_ref[...].astype(jnp.float32))

    ws_n = jnp.sum(ws, axis=0)                      # (TC, TL)  VPU
    sq_n = jnp.sum(ws * ws, axis=0)                 # (TC, TL)  VPU
    # (TC, 1) partials broadcast-accumulated across all 128 lanes of the stats tile.
    sum_ref[...] += jnp.sum(ws_n, axis=-1, keepdims=True)
    sq_ref[...] += jnp.sum(sq_n, axis=-1, keepdims=True)


def fusion_norm_kernel(w_ref, x1_ref, x2_ref, x3_ref, sum_ref, sq_ref, o_ref,
                       *, inv_count):
    """Two-pass, pass 2: re-read inputs, normalize with the precomputed stats."""
    w0 = w_ref[0]
    w1 = w_ref[1]
    w2 = w_ref[2]

    ws = (w0 * x1_ref[...].astype(jnp.float32)
          + w1 * x2_ref[...].astype(jnp.float32)
          + w2 * x3_ref[...].astype(jnp.float32))

    sums = sum_ref[...]                              # (TC, 128), value replicated in lanes
    sqs = sq_ref[...]
    mean = sums[:, :1] * inv_count                   # (TC, 1)
    # TODO(synk): E[x^2] - mean^2 can lose precision for large |mean|; acceptable
    # for this fallback path (f32 accumulation), matches common BN implementations.
    var = sqs[:, :1] * inv_count - mean * mean       # (TC, 1)

    o_ref[...] = ((ws - mean[None, :, :])
                  * lax.rsqrt(var + EPS)[None, :, :]).astype(o_ref.dtype)


# --------------------------------------------------------------------------
# Tiling / VMEM budgeting helpers
# --------------------------------------------------------------------------
def _vmem_capacity_bytes():
    try:
        return int(pltpu.get_tpu_info().vmem_capacity_bytes)
    except Exception:
        return 64 << 20  # conservative default (v7x per-TC VMEM)


def _per_block_bytes(N, tc, tl, itemsize):
    io = 8 * N * tc * tl * itemsize     # (3 inputs + 1 output) x 2 pipeline buffers
    tmp = 2 * N * tc * tl * 4           # f32 ws + centered compute temporaries
    return io + tmp


def _channel_candidates(C):
    if C % 8 != 0:
        # (8,128) rule: sublane block dim must be %8 or the full extent.
        return [C]
    return [tc for tc in range(8, C + 1, 8) if C % tc == 0]


def _choose_channel_tile(N, C, HW, itemsize, budget):
    """Largest fitting channel tile, preferring >=2 grid steps (v7x megacore).
    Returns None when even the smallest candidate does not fit -> two-pass path."""
    cands = _channel_candidates(C)
    fitting = [tc for tc in cands if _per_block_bytes(N, tc, HW, itemsize) <= budget]
    if not fitting:
        return None
    multi = [tc for tc in fitting if C // tc >= 2]
    return max(multi) if multi else max(fitting)


def _choose_two_pass_tiles(N, C, HW, itemsize, budget):
    tc = min(_channel_candidates(C))
    lane_cands = [tl for tl in range(128, HW + 1, 128) if HW % tl == 0]
    if not lane_cands:
        lane_cands = [HW]  # HW not 128-aligned; masked tail stores, still correct.
    fitting = [tl for tl in lane_cands if _per_block_bytes(N, tc, tl, itemsize) <= budget]
    tl = max(fitting) if fitting else min(lane_cands)
    return tc, tl


def _vmem_limit_bytes(need, cap):
    return int(min(max(need + (4 << 20), 32 << 20), cap))


# --------------------------------------------------------------------------
# Wrapper
# --------------------------------------------------------------------------
def weighted_feature_fusion(weights, x1, x2, x3, *, vmem_budget_bytes=None):
    """weights: (3,) f32; x1,x2,x3: (N, C, H, W). Returns (N, C, H, W)."""
    N, C, H, W = x1.shape
    HW = H * W
    itemsize = jnp.dtype(x1.dtype).itemsize

    # Free reshapes (merge trailing dims) — no HBM round trip.
    x1r = x1.reshape(N, C, HW)
    x2r = x2.reshape(N, C, HW)
    x3r = x3.reshape(N, C, HW)

    cap = _vmem_capacity_bytes()
    budget = int(vmem_budget_bytes) if vmem_budget_bytes is not None else int(0.40 * cap)

    smem_spec = pl.BlockSpec(memory_space=pltpu.MemorySpace.SMEM)

    TC = _choose_channel_tile(N, C, HW, itemsize, budget)

    if TC is not None:
        # ---------------- single-pass path ----------------
        block = (N, TC, HW)
        data_spec = pl.BlockSpec(block, lambda c: (0, c, 0))
        need = _per_block_bytes(N, TC, HW, itemsize)

        out = pl.pallas_call(
            fusion_bn_kernel,
            out_shape=jax.ShapeDtypeStruct((N, C, HW), x1.dtype),
            grid_spec=pltpu.PrefetchScalarGridSpec(
                num_scalar_prefetch=0,
                grid=(C // TC,),
                in_specs=[smem_spec, data_spec, data_spec, data_spec],
                out_specs=pl.BlockSpec(block, lambda c: (0, c, 0)),
            ),
            compiler_params=pltpu.CompilerParams(
                dimension_semantics=("parallel",),
                vmem_limit_bytes=_vmem_limit_bytes(need, cap),
            ),
            cost_estimate=pl.CostEstimate(
                flops=10 * N * C * HW,
                transcendentals=C,
                bytes_accessed=4 * N * C * HW * itemsize,
            ),
        )(weights, x1r, x2r, x3r)
        return out.reshape(N, C, H, W)

    # ---------------- two-pass fallback (large N*H*W) ----------------
    TC, TL = _choose_two_pass_tiles(N, C, HW, itemsize, budget)
    grid = (C // TC, HW // TL)
    data_spec = pl.BlockSpec((N, TC, TL), lambda c, l: (0, c, l))
    stat_spec = pl.BlockSpec((TC, 128), lambda c, l: (c, 0))
    need = _per_block_bytes(N, TC, TL, itemsize) + 4 * TC * 128 * 4
    vmem_limit = _vmem_limit_bytes(need, cap)

    sums, sqs = pl.pallas_call(
        fusion_stats_kernel,
        out_shape=(jax.ShapeDtypeStruct((C, 128), jnp.float32),
                   jax.ShapeDtypeStruct((C, 128), jnp.float32)),
        grid_spec=pltpu.PrefetchScalarGridSpec(
            num_scalar_prefetch=0,
            grid=grid,
            in_specs=[smem_spec, data_spec, data_spec, data_spec],
            out_specs=(stat_spec, stat_spec),
        ),
        compiler_params=pltpu.CompilerParams(
            dimension_semantics=("parallel", "arbitrary"),
            vmem_limit_bytes=vmem_limit,
        ),
        cost_estimate=pl.CostEstimate(
            flops=8 * N * C * HW,
            transcendentals=0,
            bytes_accessed=3 * N * C * HW * itemsize,
        ),
    )(weights, x1r, x2r, x3r)

    norm_kernel = functools.partial(fusion_norm_kernel, inv_count=1.0 / float(N * HW))
    out = pl.pallas_call(
        norm_kernel,
        out_shape=jax.ShapeDtypeStruct((N, C, HW), x1.dtype),
        grid_spec=pltpu.PrefetchScalarGridSpec(
            num_scalar_prefetch=0,
            grid=grid,
            in_specs=[smem_spec, data_spec, data_spec, data_spec,
                      stat_spec, stat_spec],
            out_specs=pl.BlockSpec((N, TC, TL), lambda c, l: (0, c, l)),
        ),
        compiler_params=pltpu.CompilerParams(
            dimension_semantics=("parallel", "parallel"),
            vmem_limit_bytes=vmem_limit,
        ),
        cost_estimate=pl.CostEstimate(
            flops=10 * N * C * HW,
            transcendentals=C,
            bytes_accessed=4 * N * C * HW * itemsize,
        ),
    )(weights, x1r, x2r, x3r, sums, sqs)
    return out.reshape(N, C, H, W)


# --------------------------------------------------------------------------
# Reference + test
# --------------------------------------------------------------------------
def reference(weights, x1, x2, x3):
    ws = weights[0] * x1 + weights[1] * x2 + weights[2] * x3
    mean = jnp.mean(ws, axis=(0, 2, 3), keepdims=True)
    var = jnp.mean((ws - mean) ** 2, axis=(0, 2, 3), keepdims=True)
    return (ws - mean) * lax.rsqrt(var + EPS)


if __name__ == "__main__":
    key = jax.random.PRNGKey(0)
    k1, k2, k3 = jax.random.split(key, 3)

    N, C, H, W = 2, 4, 16, 16
    x1 = jax.random.normal(k1, (N, C, H, W), dtype=jnp.float32)
    x2 = jax.random.normal(k2, (N, C, H, W), dtype=jnp.float32)
    x3 = jax.random.normal(k3, (N, C, H, W), dtype=jnp.float32)

    # nn.Parameter(torch.ones(3)) — deterministic init
    weights = jnp.ones((3,), dtype=jnp.float32)

    ref = reference(weights, x1, x2, x3)

    # Single-pass path (default, generation-aware VMEM budget).
    out = jax.block_until_ready(weighted_feature_fusion(weights, x1, x2, x3))
    assert out.shape == (N, C, H, W)
    assert jnp.allclose(out, ref, atol=1e-4, rtol=1e-4)

    # Two-pass fallback path (large-feature-map regime), exercised at this small
    # shape by forcing a tiny tile budget so the full-HW slab "doesn't fit".
    out2 = jax.block_until_ready(
        weighted_feature_fusion(weights, x1, x2, x3, vmem_budget_bytes=64 << 10))
    assert out2.shape == (N, C, H, W)
    assert jnp.allclose(out2, ref, atol=1e-4, rtol=1e-4)

    print("KERNEL_OK")
</pallas_src>

<mosaic_0001>
module attributes {stable_mosaic.version = 11 : i64} {
  func.func @fusion_bn_kernel(%arg0: i32, %arg1: memref<3xf32, #tpu.memory_space<smem>>, %arg2: memref<2x4x256xf32, #tpu.memory_space<vmem>>, %arg3: memref<2x4x256xf32, #tpu.memory_space<vmem>>, %arg4: memref<2x4x256xf32, #tpu.memory_space<vmem>>, %arg5: memref<2x4x256xf32, #tpu.memory_space<vmem>>) attributes {dimension_semantics = [#tpu.dimension_semantics<parallel>], iteration_bounds = array<i64: 1>, scalar_prefetch = 0 : i64, scratch_operands = 0 : i64, tpu.core_type = #tpu.core_type<tc>, window_params = [{transform_indices = @transform_0, window_bounds = array<i64: 3>}, {transform_indices = @transform_1, window_bounds = array<i64: 2, 4, 256>}, {transform_indices = @transform_2, window_bounds = array<i64: 2, 4, 256>}, {transform_indices = @transform_3, window_bounds = array<i64: 2, 4, 256>}, {transform_indices = @transform_4, window_bounds = array<i64: 2, 4, 256>}]} {
    %c0 = arith.constant 0 : index
    %0 = memref.load %arg1[%c0] : memref<3xf32, #tpu.memory_space<smem>>
    %c1 = arith.constant 1 : index
    %1 = memref.load %arg1[%c1] : memref<3xf32, #tpu.memory_space<smem>>
    %c2 = arith.constant 2 : index
    %2 = memref.load %arg1[%c2] : memref<3xf32, #tpu.memory_space<smem>>
    %c0_0 = arith.constant 0 : index
    %c0_1 = arith.constant 0 : index
    %c0_2 = arith.constant 0 : index
    %3 = vector.load %arg2[%c0_0, %c0_1, %c0_2] : memref<2x4x256xf32, #tpu.memory_space<vmem>>, vector<2x4x256xf32>
    %4 = vector.broadcast %0 : f32 to vector<2x4x256xf32>
    %5 = arith.mulf %4, %3 : vector<2x4x256xf32>
    %c0_3 = arith.constant 0 : index
    %c0_4 = arith.constant 0 : index
    %c0_5 = arith.constant 0 : index
    %6 = vector.load %arg3[%c0_3, %c0_4, %c0_5] : memref<2x4x256xf32, #tpu.memory_space<vmem>>, vector<2x4x256xf32>
    %7 = vector.broadcast %1 : f32 to vector<2x4x256xf32>
    %8 = arith.mulf %7, %6 : vector<2x4x256xf32>
    %9 = arith.addf %5, %8 : vector<2x4x256xf32>
    %c0_6 = arith.constant 0 : index
    %c0_7 = arith.constant 0 : index
    %c0_8 = arith.constant 0 : index
    %10 = vector.load %arg4[%c0_6, %c0_7, %c0_8] : memref<2x4x256xf32, #tpu.memory_space<vmem>>, vector<2x4x256xf32>
    %11 = vector.broadcast %2 : f32 to vector<2x4x256xf32>
    %12 = arith.mulf %11, %10 : vector<2x4x256xf32>
    %13 = arith.addf %9, %12 : vector<2x4x256xf32>
    %cst = arith.constant dense<0.000000e+00> : vector<4x256xf32>
    %14 = vector.multi_reduction <add>, %13, %cst [0] : vector<2x4x256xf32> to vector<4x256xf32>
    %cst_9 = arith.constant dense<0.000000e+00> : vector<4xf32>
    %15 = vector.multi_reduction <add>, %14, %cst_9 [1] : vector<4x256xf32> to vector<4xf32>
    %16 = vector.shape_cast %15 : vector<4xf32> to vector<4x1xf32>
    %cst_10 = arith.constant 0.001953125 : f32
    %17 = vector.broadcast %cst_10 : f32 to vector<4x1xf32>
    %18 = arith.mulf %16, %17 : vector<4x1xf32>
    %19 = vector.shape_cast %18 : vector<4x1xf32> to vector<1x4x1xf32>
    %20 = vector.broadcast %19 : vector<1x4x1xf32> to vector<2x4x256xf32>
    %21 = arith.subf %13, %20 : vector<2x4x256xf32>
    %22 = arith.mulf %21, %21 : vector<2x4x256xf32>
    %cst_11 = arith.constant dense<0.000000e+00> : vector<4x256xf32>
    %23 = vector.multi_reduction <add>, %22, %cst_11 [0] : vector<2x4x256xf32> to vector<4x256xf32>
    %cst_12 = arith.constant dense<0.000000e+00> : vector<4xf32>
    %24 = vector.multi_reduction <add>, %23, %cst_12 [1] : vector<4x256xf32> to vector<4xf32>
    %25 = vector.shape_cast %24 : vector<4xf32> to vector<4x1xf32>
    %cst_13 = arith.constant 0.001953125 : f32
    %26 = vector.broadcast %cst_13 : f32 to vector<4x1xf32>
    %27 = arith.mulf %25, %26 : vector<4x1xf32>
    %cst_14 = arith.constant 9.99999974E-6 : f32
    %28 = vector.broadcast %cst_14 : f32 to vector<4x1xf32>
    %29 = arith.addf %27, %28 : vector<4x1xf32>
    %30 = math.rsqrt %29 : vector<4x1xf32>
    %31 = vector.shape_cast %30 : vector<4x1xf32> to vector<1x4x1xf32>
    %32 = vector.broadcast %31 : vector<1x4x1xf32> to vector<2x4x256xf32>
    %33 = arith.mulf %21, %32 : vector<2x4x256xf32>
    %c0_15 = arith.constant 0 : index
    %c0_16 = arith.constant 0 : index
    %c0_17 = arith.constant 0 : index
    %34 = vector.load %arg5[%c0_15, %c0_16, %c0_17] : memref<2x4x256xf32, #tpu.memory_space<vmem>>, vector<2x4x256xf32>
    tpu.vector_store %arg5[%c0_15, %c0_16, %c0_17], %33 {strides = array<i32>} : memref<2x4x256xf32, #tpu.memory_space<vmem>>, vector<2x4x256xf32>,
    return
  }
  func.func @transform_0(%arg0: i32) -> i32 {
    %c0_i32 = arith.constant 0 : i32
    %c0_i32_0 = arith.constant 0 : i32
    return %c0_i32 : i32
  }
  func.func @transform_1(%arg0: i32) -> (i32, i32, i32) {
    %c0_i32 = arith.constant 0 : i32
    %c0_i32_0 = arith.constant 0 : i32
    %c0_i32_1 = arith.constant 0 : i32
    return %c0_i32, %arg0, %c0_i32_0 : i32, i32, i32
  }
  func.func @transform_2(%arg0: i32) -> (i32, i32, i32) {
    %c0_i32 = arith.constant 0 : i32
    %c0_i32_0 = arith.constant 0 : i32
    %c0_i32_1 = arith.constant 0 : i32
    return %c0_i32, %arg0, %c0_i32_0 : i32, i32, i32
  }
  func.func @transform_3(%arg0: i32) -> (i32, i32, i32) {
    %c0_i32 = arith.constant 0 : i32
    %c0_i32_0 = arith.constant 0 : i32
    %c0_i32_1 = arith.constant 0 : i32
    return %c0_i32, %arg0, %c0_i32_0 : i32, i32, i32
  }
  func.func @transform_4(%arg0: i32) -> (i32, i32, i32) {
    %c0_i32 = arith.constant 0 : i32
    %c0_i32_0 = arith.constant 0 : i32
    %c0_i32_1 = arith.constant 0 : i32
    return %c0_i32, %arg0, %c0_i32_0 : i32, i32, i32
  }
}

</mosaic_0001>

<llo_original>
// kernel: tpu_custom_call.1
$region0: #{tpu_custom_call.1}
  #allocation0 [shape = 'u32[]', space=smem, size = 0x4, offset = 0x4, fixed_abs, tag = 'smem constant byte address 0x4 - core index']
  #allocation1 [shape = 'u32[144,128]{1,0:T(1,128)}', space=vmem, size = 0x12000, scoped, tag = 'internal scratch']
  %s0 = inlined_call_operand.hbm [shape: f32[3], index: 0, kind: input, shape index: {}]
  %s1 = inlined_call_operand.hbm [shape: f32[2,4,256], index: 1, kind: input, shape index: {}]
  %s2 = inlined_call_operand.hbm [shape: f32[2,4,256], index: 2, kind: input, shape index: {}]
  %s3 = inlined_call_operand.hbm [shape: f32[2,4,256], index: 3, kind: input, shape index: {}]
  %s4 = inlined_call_operand.hbm [shape: f32[2,4,256], index: 4, kind: output, shape index: {}]
  %s5 = sld [smem:[#allocation0]]
  $region42: #{tpu_custom_call.1} parent=0
    _
  %s7 = ssub.s32 1, %s5
  %s8 = scalar_select 0, %s7, %s5
  $region1: #{tpu_custom_call.1} parent=0
    #allocation2 [shape = 'u8[512]{0}', space=smem, size = 0x200, scoped, tag = 'input window, operand 0, single buffered']
    #allocation3 [shape = 's32[1]{0}', space=sflag, size = 0x4, scoped, tag = 'scoped memory for tpu_custom_call.1']
    #allocation4 [shape = 's32[1]{0}', space=sflag, size = 0x4, scoped, tag = 'scoped memory for tpu_custom_call.1']
    #allocation5 [shape = 's32[1]{0}', space=sflag, size = 0x4, scoped, tag = 'scoped memory for tpu_custom_call.1']
    #allocation6 [shape = 'u8[8192]{0}', space=vmem, size = 0x2000, scoped, tag = 'input window, operand 1, single buffered']
    #allocation7 [shape = 'u8[8192]{0}', space=vmem, size = 0x2000, scoped, tag = 'input window, operand 2, single buffered']
    #allocation8 [shape = 's32[1]{0}', space=sflag, size = 0x4, scoped, tag = 'scoped memory for tpu_custom_call.1']
    #allocation9 [shape = 'u8[8192]{0}', space=vmem, size = 0x2000, scoped, tag = 'input window, operand 3, single buffered']
    #allocation10 [shape = 'u8[8192]{0}', space=vmem, size = 0x2000, scoped, tag = 'output window, operand 0, single buffered']
    %9 = vsyncpa [#allocation5], 0
    %10 = vsyncpa [#allocation3], 0
    %11 = vsyncpa [#allocation8], 0
    %12 = vsyncpa [#allocation4], 0
    // Predicated region
    $region2: #{tpu_custom_call.1} parent=1 // pred_check
      _
    $region3: #{tpu_custom_call.1} parent=1 // pred_check_branch
      %14 = sbr.rel (0) target = $region5
    $region4: #{tpu_custom_call.1} parent=1 // pred_region
      %s16 = ssub.s32 16, 16
      %17 = vsyncadd [#allocation5], %s16
      %20 = dma.hbm_to_smem %s0, 16, [#allocation2], [#allocation5]
    $region5: #{tpu_custom_call.1} parent=1 // pred_fallthru
      _
    // Predicated region
    $region6: #{tpu_custom_call.1} parent=1 // pred_check
      _
    $region7: #{tpu_custom_call.1} parent=1 // pred_check_branch
      %22 = sbr.rel (0) target = $region9
    $region8: #{tpu_custom_call.1} parent=1 // pred_region
      %s24 = ssub.s32 256, 256
      %25 = vsyncadd [#allocation3], %s24
      %s26 = sshll.u32 [#allocation6], 4
      %s27 = int_to_ptr.vmem [resolvable:$true] %s26
      %32 = dma.hbm_to_vmem [thread:$0]  %s1, 256, %s27, [#allocation3], 128, 128, 8
    $region9: #{tpu_custom_call.1} parent=1 // pred_fallthru
      _
    // Predicated region
    $region10: #{tpu_custom_call.1} parent=1 // pred_check
      _
    $region11: #{tpu_custom_call.1} parent=1 // pred_check_branch
      %34 = sbr.rel (0) target = $region13
    $region12: #{tpu_custom_call.1} parent=1 // pred_region
      %s36 = ssub.s32 256, 256
      %37 = vsyncadd [#allocation8], %s36
      %s38 = sshll.u32 [#allocation7], 4
      %s39 = int_to_ptr.vmem [resolvable:$true] %s38
      %44 = dma.hbm_to_vmem [thread:$0]  %s2, 256, %s39, [#allocation8], 128, 128, 8
    $region13: #{tpu_custom_call.1} parent=1 // pred_fallthru
      _
    // Predicated region
    $region14: #{tpu_custom_call.1} parent=1 // pred_check
      _
    $region15: #{tpu_custom_call.1} parent=1 // pred_check_branch
      %46 = sbr.rel (0) target = $region17
    $region16: #{tpu_custom_call.1} parent=1 // pred_region
      %s48 = ssub.s32 256, 256
      %49 = vsyncadd [#allocation8], %s48
      %s50 = sshll.u32 [#allocation9], 4
      %s51 = int_to_ptr.vmem [resolvable:$true] %s50
      %56 = dma.hbm_to_vmem [thread:$0]  %s3, 256, %s51, [#allocation8], 128, 128, 8
    $region17: #{tpu_custom_call.1} parent=1 // pred_fallthru
      _
    // Predicated region
    $region18: #{tpu_custom_call.1} parent=1 // pred_check
      _
    $region19: #{tpu_custom_call.1} parent=1 // pred_check_branch
      %58 = sbr.rel (0) target = $region21
    $region20: #{tpu_custom_call.1} parent=1 // pred_region
      %59 = dma.done [#allocation5], 16
    $region21: #{tpu_custom_call.1} parent=1 // pred_fallthru
      _
    // Predicated region
    $region22: #{tpu_custom_call.1} parent=1 // pred_check
      _
    $region23: #{tpu_custom_call.1} parent=1 // pred_check_branch
      %61 = sbr.rel (0) target = $region25
    $region24: #{tpu_custom_call.1} parent=1 // pred_region
      %62 = dma.done [#allocation3], 256
    $region25: #{tpu_custom_call.1} parent=1 // pred_fallthru
      _
    // Predicated region
    $region26: #{tpu_custom_call.1} parent=1 // pred_check
      _
    $region27: #{tpu_custom_call.1} parent=1 // pred_check_branch
      %64 = sbr.rel (0) target = $region29
    $region28: #{tpu_custom_call.1} parent=1 // pred_region
      %65 = dma.done [#allocation8], 256
    $region29: #{tpu_custom_call.1} parent=1 // pred_fallthru
      _
    // Predicated region
    $region30: #{tpu_custom_call.1} parent=1 // pred_check
      _
    $region31: #{tpu_custom_call.1} parent=1 // pred_check_branch
      %67 = sbr.rel (0) target = $region33
    $region32: #{tpu_custom_call.1} parent=1 // pred_region
      %68 = dma.done [#allocation8], 256
    $region33: #{tpu_custom_call.1} parent=1 // pred_fallthru
      _
    %69 = sfence
    %s70 = sld [smem:[#allocation2]]
    %s71 = sld [smem:[#allocation2 + $0x1]]
    %s72 = sld [smem:[#allocation2 + $0x2]]
    %v73 = vld [vmem:[#allocation6] sm:$0xff]
    %v74 = vld [vmem:[#allocation6 + $0x8] sm:$0xff]
    %v75 = vstv %s70
    %v76 = vmul.f32 %v75, %v73
    %v77 = vmul.f32 %v75, %v74
    %v78 = vld [vmem:[#allocation7] sm:$0xff]
    %v79 = vld [vmem:[#allocation7 + $0x8] sm:$0xff]
    %v80 = vstv %s71
    %v81 = vmul.f32 %v80, %v78
    %v82 = vmul.f32 %v80, %v79
    %v83 = vadd.f32 %v76, %v81
    %v84 = vadd.f32 %v77, %v82
    %v85 = vld [vmem:[#allocation9] sm:$0xff]
    %v86 = vld [vmem:[#allocation9 + $0x8] sm:$0xff]
    %v87 = vstv %s72
    %v88 = vmul.f32 %v87, %v85
    %v89 = vmul.f32 %v87, %v86
    %v90 = vadd.f32 %v83, %v88
    %v91 = vadd.f32 %v84, %v89
    %v94 = vcombine.high %v90, %v90
    %v95 = vcombine.high %v91, %v91
    %vm98 = vcmask 1043456
    %v99 = vsel %vm98, %v90, 0.0
    %v100 = vsel %vm98, %v91, 0.0
    %v101 = vadd.f32 %v99, %v100
    %v102 = vsel %vm98, %v94, 0.0
    %v103 = vsel %vm98, %v95, 0.0
    %v104 = vadd.f32 %v102, %v103
    %v105 = vsel %vm98, %v101, 0.0
    %v106 = vsel %vm98, %v104, 0.0
    %v107 = vadd.f32 %v105, %v106
    %108 = vadd.xlane.f32.xlu0 %v107
    %v109 = vpop.xlane.xlu0 %108
    %v110 = vmul.f32 %v109, 0.001953125
    %v113 = vunpack.c.l.s4 839922192
    %v114 = vunpack.c.0.s8 %v113
    %v115 = vlaneseq
    %v116 = vshrl.u32 %v115, 7
    %v117 = vsub.s32 %v114, %v116
    %v118 = vrot.slane %v110, %v117
    %v120 = vsub.f32 %v90, %v118
    %v121 = vsub.f32 %v91, %v118
    %v122 = vmul.f32 %v120, %v120
    %v123 = vmul.f32 %v121, %v121
    %v126 = vcombine.high %v122, %v122
    %v127 = vcombine.high %v123, %v123
    %v130 = vsel %vm98, %v122, 0.0
    %v131 = vsel %vm98, %v123, 0.0
    %v132 = vadd.f32 %v130, %v131
    %v133 = vsel %vm98, %v126, 0.0
    %v134 = vsel %vm98, %v127, 0.0
    %v135 = vadd.f32 %v133, %v134
    %v136 = vsel %vm98, %v132, 0.0
    %v137 = vsel %vm98, %v135, 0.0
    %v138 = vadd.f32 %v136, %v137
    %139 = vadd.xlane.f32.xlu0 %v138
    %v140 = vpop.xlane.xlu0 %139
    %v141 = vmul.f32 %v140, 0.001953125
    %v142 = vadd.f32 %v141, 1e-05
    %v143 = vrsqrt.pop %v142
    %v146 = vunpack.c.l.s4 839922192
    %v147 = vunpack.c.0.s8 %v146
    %v148 = vlaneseq
    %v149 = vshrl.u32 %v148, 7
    %v150 = vsub.s32 %v147, %v149
    %v151 = vrot.slane %v143, %v150
    %v153 = vmul.f32 %v120, %v151
    %v154 = vmul.f32 %v121, %v151
    %155 = vst [vmem:[#allocation10] sm:$0xff] %v153
    %156 = vst [vmem:[#allocation10 + $0x8] sm:$0xff] %v154
    // Predicated region
    $region34: #{tpu_custom_call.1} parent=1 // pred_check
      _
    $region35: #{tpu_custom_call.1} parent=1 // pred_check_branch
      %158 = sbr.rel (0) target = $region37
    $region36: #{tpu_custom_call.1} parent=1 // pred_region
      %s160 = ssub.s32 256, 256
      %161 = vsyncadd [#allocation4], %s160
      %s162 = sshll.u32 [#allocation10], 4
      %s163 = int_to_ptr.vmem [resolvable:$true] %s162
      %168 = dma.vmem_to_hbm [thread:$0]  %s163, 256, %s4, [#allocation4], 128, 128, 8
    $region37: #{tpu_custom_call.1} parent=1 // pred_fallthru
      _
    // Predicated region
    $region38: #{tpu_custom_call.1} parent=1 // pred_check
      _
    $region39: #{tpu_custom_call.1} parent=1 // pred_check_branch
      %170 = sbr.rel (0) target = $region41
    $region40: #{tpu_custom_call.1} parent=1 // pred_region
      %171 = dma.done [#allocation4], 256
    $region41: #{tpu_custom_call.1} parent=1 // pred_fallthru
      _
    %172 = vsyncpa [#allocation3], 1
    %173 = vsyncpa [#allocation8], 1
    %174 = vsyncpa [#allocation4], 1
    %175 = vsyncpa [#allocation5], 1

</llo_original>
